<compile_context>
chip_gen: v7x
topology: tpu7x:2x2x1
jax: 0.10.0
libtpu: 0.0.40
codegen_flags: <defaults>
</compile_context>

<pallas_src>
import functools

import jax
import jax.numpy as jnp
from jax.experimental import pallas as pl
from jax.experimental.pallas import tpu as pltpu


def _frac_encoder_kernel(x_ref, hi_ref, mid_ref, lo_ref, o_ref, *,
                         resolution: int, log10: bool, res_pad: int):
    # x_ref:   (TN, 1)              f32  fractions (sublane-minor)
    # hi/mid/lo_ref: (res_pad, d_half) bf16  3-way split of the pe table (resident)
    # o_ref:   (TN, d_half)         f32  output tile (direct (N, d_half) layout)
    x = x_ref[...]                                            # (TN, 1)

    if log10:
        x = 0.0025 * jnp.square(jnp.log2(x))                  # 0.0025 * log2(x)**2
        x = jnp.minimum(x, 1.0)                               # clamp(max=1)
    x = jnp.maximum(x, 1.0 / resolution)                      # clamp(min=1/resolution)

    # frac_idx = round(x * resolution) - 1 (round-half-to-even, matches torch.round)
    idx = jnp.round(x * resolution).astype(jnp.int32) - 1     # (TN, 1)
    # Guard: torch would index-error for x > 1 (non-log path) / NaN; clamp instead.
    idx = jnp.clip(idx, 0, resolution - 1)

    # One-hot rows over the (padded) table, built by broadcasting a single lane iota
    # against the sublane-varying idx.  Entries are exactly 0/1 -> exact in bf16.
    col = jax.lax.broadcasted_iota(jnp.int32, (1, res_pad), 1)
    onehot = (idx == col).astype(jnp.bfloat16)                # (TN, res_pad)

    # Exact row gather on the MXU: each bf16 x bf16 product is exact in f32, and the
    # three splits sum back to the f32 pe table (error <~1e-7).
    acc = jnp.dot(onehot, hi_ref[...], preferred_element_type=jnp.float32)
    acc = acc + jnp.dot(onehot, mid_ref[...], preferred_element_type=jnp.float32)
    acc = acc + jnp.dot(onehot, lo_ref[...], preferred_element_type=jnp.float32)
    o_ref[...] = acc


def make_pe_table(d_model: int, resolution: int = 100) -> jnp.ndarray:
    """Deterministic buffer construction, matching the PyTorch __init__ exactly."""
    d_half = d_model // 2
    x = jnp.linspace(0.0, resolution - 1, resolution).reshape(resolution, 1)
    fraction = jnp.linspace(0.0, d_half - 1, d_half).reshape(1, d_half)
    fraction = jnp.broadcast_to(fraction, (resolution, d_half))

    pe = jnp.zeros((resolution, d_half), dtype=jnp.float32)
    pe = pe.at[:, 0::2].set(
        jnp.sin(x / jnp.power(50.0, 2.0 * fraction[:, 0::2] / d_half)))
    pe = pe.at[:, 1::2].set(
        jnp.cos(x / jnp.power(50.0, 2.0 * fraction[:, 1::2] / d_half)))
    return pe.astype(jnp.float32)


def fractional_encoder(x: jnp.ndarray,
                       pe: jnp.ndarray,
                       *,
                       resolution: int = 100,
                       log10: bool = False,
                       tile_n: int = 4096) -> jnp.ndarray:
    """Pallas-backed forward. x: arbitrary-shaped fractions; returns x.shape + (d_half,)."""
    d_half = pe.shape[1]
    orig_shape = x.shape
    n = int(x.size)

    # Pad the table depth to a full lane width (zero rows are never selected),
    # then split into three bf16 terms whose sum reproduces the f32 table.
    res_pad = ((max(resolution, 1) + 127) // 128) * 128       # 100 -> 128
    pe_pad = jnp.zeros((res_pad, d_half), jnp.float32).at[:pe.shape[0], :].set(
        pe.astype(jnp.float32))
    pe_hi = pe_pad.astype(jnp.bfloat16)
    r1 = pe_pad - pe_hi.astype(jnp.float32)
    pe_mid = r1.astype(jnp.bfloat16)
    r2 = r1 - pe_mid.astype(jnp.float32)
    pe_lo = r2.astype(jnp.bfloat16)

    # Tile: multiple of 128, capped at tile_n, and small enough to give >=2 grid
    # tiles whenever n > 128 so the "parallel" axis can use both v7x TensorCores.
    tile_n = max(128, (tile_n // 128) * 128)
    half = ((pl.cdiv(n, 2) + 127) // 128) * 128
    tile = max(128, min(tile_n, half))
    num_tiles = pl.cdiv(n, tile)
    n_pad = num_tiles * tile

    # Sublane-minor x layout (idx must vary along sublanes to match the one-hot
    # rows).  Pad value 1.0 is valid for both paths; padded rows are discarded.
    x_flat = x.reshape(-1).astype(jnp.float32)
    x2 = jnp.full((n_pad, 1), 1.0, jnp.float32).at[:n, 0].set(x_flat)

    kernel = functools.partial(_frac_encoder_kernel,
                               resolution=resolution, log10=log10,
                               res_pad=res_pad)

    cost = pl.CostEstimate(
        flops=2 * 3 * n_pad * res_pad * d_half,
        transcendentals=n_pad if log10 else 0,
        bytes_accessed=n_pad * 4 + n_pad * d_half * 4 + 3 * res_pad * d_half * 2,
    )

    # VMEM budget: double-buffered output + x blocks, resident pe splits, one-hot
    # temporaries.  Only raise the scoped limit if we exceed the smallest (v5e)
    # default of 16 MiB; default tile=4096 stays well under it.
    vmem_need = (2 * tile * d_half * 4
                 + 2 * tile * 4
                 + 2 * 3 * res_pad * d_half * 2
                 + 3 * tile * res_pad * 4)
    cp_kwargs = dict(dimension_semantics=("parallel",))
    if vmem_need > 16 * 1024 * 1024:
        cp_kwargs["vmem_limit_bytes"] = int(min(100 * 1024 * 1024,
                                                1.25 * vmem_need))

    out_pad = pl.pallas_call(
        kernel,
        out_shape=jax.ShapeDtypeStruct((n_pad, d_half), jnp.float32),
        grid=(num_tiles,),
        in_specs=[
            pl.BlockSpec((tile, 1), lambda i: (i, 0)),            # x tile
            pl.BlockSpec((res_pad, d_half), lambda i: (0, 0)),    # pe hi  (resident)
            pl.BlockSpec((res_pad, d_half), lambda i: (0, 0)),    # pe mid (resident)
            pl.BlockSpec((res_pad, d_half), lambda i: (0, 0)),    # pe lo  (resident)
        ],
        out_specs=pl.BlockSpec((tile, d_half), lambda i: (i, 0)),  # direct layout
        compiler_params=pltpu.CompilerParams(**cp_kwargs),
        cost_estimate=cost,
    )(x2, pe_hi, pe_mid, pe_lo)

    # No transpose needed any more: just drop padding rows and reshape.
    out = out_pad[:n]
    return out.reshape(*orig_shape, d_half)


def _reference(x, pe, *, resolution, log10):
    xr = x.astype(jnp.float32)
    if log10:
        xr = 0.0025 * jnp.square(jnp.log2(xr))
        xr = jnp.minimum(xr, 1.0)
    xr = jnp.maximum(xr, 1.0 / resolution)
    idx = jnp.round(xr * resolution).astype(jnp.int32) - 1
    idx = jnp.clip(idx, 0, resolution - 1)
    return jnp.take(pe, idx, axis=0)


if __name__ == "__main__":
    d_model = 32          # -> d_half = 16
    resolution = 100
    key = jax.random.PRNGKey(0)
    pe = make_pe_table(d_model, resolution)

    # Small case matching the module's typical use: (batch=2, seq=8) fractions in (0, 1].
    k1, k2 = jax.random.split(key)
    x_small = jax.random.uniform(k1, (2, 8), dtype=jnp.float32,
                                 minval=1e-3, maxval=1.0)
    out_small = jax.block_until_ready(
        fractional_encoder(x_small, pe, resolution=resolution, log10=False))
    ref_small = _reference(x_small, pe, resolution=resolution, log10=False)
    assert out_small.shape == (2, 8, d_model // 2), out_small.shape
    assert jnp.allclose(out_small, ref_small, atol=1e-6), \
        float(jnp.max(jnp.abs(out_small - ref_small)))

    # Larger case to exercise multiple grid tiles, plus the log10 branch.
    x_big = jax.random.uniform(k2, (16, 1024), dtype=jnp.float32,
                               minval=1e-3, maxval=1.0)
    out_big = jax.block_until_ready(
        fractional_encoder(x_big, pe, resolution=resolution, log10=True))
    ref_big = _reference(x_big, pe, resolution=resolution, log10=True)
    assert out_big.shape == (16, 1024, d_model // 2), out_big.shape
    assert jnp.allclose(out_big, ref_big, atol=1e-6), \
        float(jnp.max(jnp.abs(out_big - ref_big)))

    print("KERNEL_OK")
</pallas_src>

<mosaic_0001>
module attributes {stable_mosaic.version = 11 : i64} {
  func.func @_frac_encoder_kernel(%arg0: i32, %arg1: memref<128x1xf32, #tpu.memory_space<vmem>>, %arg2: memref<128x16xbf16, #tpu.memory_space<vmem>>, %arg3: memref<128x16xbf16, #tpu.memory_space<vmem>>, %arg4: memref<128x16xbf16, #tpu.memory_space<vmem>>, %arg5: memref<128x16xf32, #tpu.memory_space<vmem>>) attributes {dimension_semantics = [#tpu.dimension_semantics<parallel>], iteration_bounds = array<i64: 1>, scalar_prefetch = 0 : i64, scratch_operands = 0 : i64, tpu.core_type = #tpu.core_type<tc>, window_params = [{transform_indices = @transform_0, window_bounds = array<i64: 128, 1>}, {pipeline_mode = #tpu.pipeline_mode<synchronous>, transform_indices = @transform_1, window_bounds = array<i64: 128, 16>}, {pipeline_mode = #tpu.pipeline_mode<synchronous>, transform_indices = @transform_2, window_bounds = array<i64: 128, 16>}, {pipeline_mode = #tpu.pipeline_mode<synchronous>, transform_indices = @transform_3, window_bounds = array<i64: 128, 16>}, {transform_indices = @transform_4, window_bounds = array<i64: 128, 16>}]} {
    %c0 = arith.constant 0 : index
    %c0_0 = arith.constant 0 : index
    %0 = vector.load %arg1[%c0, %c0_0] : memref<128x1xf32, #tpu.memory_space<vmem>>, vector<128x1xf32>
    %cst = arith.constant 0.00999999977 : f32
    %1 = vector.broadcast %cst : f32 to vector<128x1xf32>
    %2 = arith.maximumf %0, %1 : vector<128x1xf32>
    %cst_1 = arith.constant 1.000000e+02 : f32
    %3 = vector.broadcast %cst_1 : f32 to vector<128x1xf32>
    %4 = arith.mulf %2, %3 : vector<128x1xf32>
    %5 = math.roundeven %4 : vector<128x1xf32>
    %6 = arith.fptosi %5 : vector<128x1xf32> to vector<128x1xi32>
    %c1_i32 = arith.constant 1 : i32
    %7 = vector.broadcast %c1_i32 : i32 to vector<128x1xi32>
    %8 = arith.subi %6, %7 : vector<128x1xi32>
    %c0_i32 = arith.constant 0 : i32
    %c99_i32 = arith.constant 99 : i32
    %9 = vector.broadcast %c0_i32 : i32 to vector<128x1xi32>
    %10 = arith.maxsi %9, %8 : vector<128x1xi32>
    %11 = vector.broadcast %c99_i32 : i32 to vector<128x1xi32>
    %12 = arith.minsi %11, %10 : vector<128x1xi32>
    %13 = tpu.iota {dimensions = array<i32: 1>} : vector<1x128xi32>
    %14 = vector.broadcast %12 : vector<128x1xi32> to vector<128x128xi32>
    %15 = vector.broadcast %13 : vector<1x128xi32> to vector<128x128xi32>
    %16 = arith.cmpi eq, %14, %15 : vector<128x128xi32>
    %17 = arith.extui %16 : vector<128x128xi1> to vector<128x128xi32>
    %18 = arith.sitofp %17 : vector<128x128xi32> to vector<128x128xf32>
    %19 = arith.truncf %18 : vector<128x128xf32> to vector<128x128xbf16>
    %c0_2 = arith.constant 0 : index
    %c0_3 = arith.constant 0 : index
    %20 = vector.load %arg2[%c0_2, %c0_3] : memref<128x16xbf16, #tpu.memory_space<vmem>>, vector<128x16xbf16>
    %cst_4 = arith.constant dense<0.000000e+00> : vector<128x16xf32>
    %21 = tpu.matmul %19, %20, %cst_4 {dimension_numbers = #tpu.dot_dimension_numbers<[1], [0], [0], [1], [0, 0, 1, 1], [], []>} : vector<128x128xbf16>, vector<128x16xbf16>, vector<128x16xf32> -> vector<128x16xf32>
    %c0_5 = arith.constant 0 : index
    %c0_6 = arith.constant 0 : index
    %22 = vector.load %arg3[%c0_5, %c0_6] : memref<128x16xbf16, #tpu.memory_space<vmem>>, vector<128x16xbf16>
    %cst_7 = arith.constant dense<0.000000e+00> : vector<128x16xf32>
    %23 = tpu.matmul %19, %22, %cst_7 {dimension_numbers = #tpu.dot_dimension_numbers<[1], [0], [0], [1], [0, 0, 1, 1], [], []>} : vector<128x128xbf16>, vector<128x16xbf16>, vector<128x16xf32> -> vector<128x16xf32>
    %24 = arith.addf %21, %23 : vector<128x16xf32>
    %c0_8 = arith.constant 0 : index
    %c0_9 = arith.constant 0 : index
    %25 = vector.load %arg4[%c0_8, %c0_9] : memref<128x16xbf16, #tpu.memory_space<vmem>>, vector<128x16xbf16>
    %cst_10 = arith.constant dense<0.000000e+00> : vector<128x16xf32>
    %26 = tpu.matmul %19, %25, %cst_10 {dimension_numbers = #tpu.dot_dimension_numbers<[1], [0], [0], [1], [0, 0, 1, 1], [], []>} : vector<128x128xbf16>, vector<128x16xbf16>, vector<128x16xf32> -> vector<128x16xf32>
    %27 = arith.addf %24, %26 : vector<128x16xf32>
    %c0_11 = arith.constant 0 : index
    %c0_12 = arith.constant 0 : index
    %28 = vector.load %arg5[%c0_11, %c0_12] : memref<128x16xf32, #tpu.memory_space<vmem>>, vector<128x16xf32>
    tpu.vector_store %arg5[%c0_11, %c0_12], %27 {strides = array<i32>} : memref<128x16xf32, #tpu.memory_space<vmem>>, vector<128x16xf32>,
    return
  }
  func.func @transform_0(%arg0: i32) -> (i32, i32) {
    %c0_i32 = arith.constant 0 : i32
    %c0_i32_0 = arith.constant 0 : i32
    return %arg0, %c0_i32 : i32, i32
  }
  func.func @transform_1(%arg0: i32) -> (i32, i32) {
    %c0_i32 = arith.constant 0 : i32
    %c0_i32_0 = arith.constant 0 : i32
    %c0_i32_1 = arith.constant 0 : i32
    return %c0_i32, %c0_i32_0 : i32, i32
  }
  func.func @transform_2(%arg0: i32) -> (i32, i32) {
    %c0_i32 = arith.constant 0 : i32
    %c0_i32_0 = arith.constant 0 : i32
    %c0_i32_1 = arith.constant 0 : i32
    return %c0_i32, %c0_i32_0 : i32, i32
  }
  func.func @transform_3(%arg0: i32) -> (i32, i32) {
    %c0_i32 = arith.constant 0 : i32
    %c0_i32_0 = arith.constant 0 : i32
    %c0_i32_1 = arith.constant 0 : i32
    return %c0_i32, %c0_i32_0 : i32, i32
  }
  func.func @transform_4(%arg0: i32) -> (i32, i32) {
    %c0_i32 = arith.constant 0 : i32
    %c0_i32_0 = arith.constant 0 : i32
    return %arg0, %c0_i32 : i32, i32
  }
}

</mosaic_0001>

<llo_original>
// kernel: tpu_custom_call.1
$region0: #{tpu_custom_call.1}
  #allocation0 [shape = 'u32[]', space=smem, size = 0x4, offset = 0x4, fixed_abs, tag = 'smem constant byte address 0x4 - core index']
  #allocation1 [shape = 'u32[144,128]{1,0:T(1,128)}', space=vmem, size = 0x12000, scoped, tag = 'internal scratch']
  %s0 = inlined_call_operand.vmem [shape: f32[128,1], index: 0, kind: input, shape index: {}]
  %s1 = inlined_call_operand.vmem [shape: bf16[128,16], index: 1, kind: input, shape index: {}]
  %s2 = inlined_call_operand.vmem [shape: bf16[128,16], index: 2, kind: input, shape index: {}]
  %s3 = inlined_call_operand.vmem [shape: bf16[128,16], index: 3, kind: input, shape index: {}]
  %s4 = inlined_call_operand.vmem [shape: f32[128,16], index: 4, kind: output, shape index: {}]
  %s5 = sld [smem:[#allocation0]]
  $region26: #{tpu_custom_call.1} parent=0
    _
  %s7 = ssub.s32 1, %s5
  %s8 = scalar_select 0, %s7, %s5
  // Predicated region
  $region2: #{tpu_custom_call.1} parent=0 // pred_check
    _
  $region3: #{tpu_custom_call.1} parent=0 // pred_check_branch
    %10 = sbr.rel (0) target = $region5
  $region4: #{tpu_custom_call.1} parent=0 // pred_region
    _
  $region5: #{tpu_custom_call.1} parent=0 // pred_fallthru
    _
  // Predicated region
  $region6: #{tpu_custom_call.1} parent=0 // pred_check
    _
  $region7: #{tpu_custom_call.1} parent=0 // pred_check_branch
    %12 = sbr.rel (0) target = $region9
  $region8: #{tpu_custom_call.1} parent=0 // pred_region
    _
  $region9: #{tpu_custom_call.1} parent=0 // pred_fallthru
    _
  // Predicated region
  $region10: #{tpu_custom_call.1} parent=0 // pred_check
    _
  $region11: #{tpu_custom_call.1} parent=0 // pred_check_branch
    %14 = sbr.rel (0) target = $region13
  $region12: #{tpu_custom_call.1} parent=0 // pred_region
    _
  $region13: #{tpu_custom_call.1} parent=0 // pred_fallthru
    _
  // Predicated region
  $region14: #{tpu_custom_call.1} parent=0 // pred_check
    _
  $region15: #{tpu_custom_call.1} parent=0 // pred_check_branch
    %16 = sbr.rel (0) target = $region17
  $region16: #{tpu_custom_call.1} parent=0 // pred_region
    _
  $region17: #{tpu_custom_call.1} parent=0 // pred_fallthru
    _
  %v18 = vld [vmem:[%s0] sm:$0xff]
  %v19 = vld [vmem:[%s0 + $0x8] sm:$0xff]
  %v20 = vld [vmem:[%s0 + $0x10] sm:$0xff]
  %v21 = vld [vmem:[%s0 + $0x18] sm:$0xff]
  %v22 = vld [vmem:[%s0 + $0x20] sm:$0xff]
  %v23 = vld [vmem:[%s0 + $0x28] sm:$0xff]
  %v24 = vld [vmem:[%s0 + $0x30] sm:$0xff]
  %v25 = vld [vmem:[%s0 + $0x38] sm:$0xff]
  %v26 = vld [vmem:[%s0 + $0x40] sm:$0xff]
  %v27 = vld [vmem:[%s0 + $0x48] sm:$0xff]
  %v28 = vld [vmem:[%s0 + $0x50] sm:$0xff]
  %v29 = vld [vmem:[%s0 + $0x58] sm:$0xff]
  %v30 = vld [vmem:[%s0 + $0x60] sm:$0xff]
  %v31 = vld [vmem:[%s0 + $0x68] sm:$0xff]
  %v32 = vld [vmem:[%s0 + $0x70] sm:$0xff]
  %v33 = vld [vmem:[%s0 + $0x78] sm:$0xff]
  %v34 = vmax.f32 %v18, 0.01
  %v35 = vmax.f32 %v19, 0.01
  %v36 = vmax.f32 %v20, 0.01
  %v37 = vmax.f32 %v21, 0.01
  %v38 = vmax.f32 %v22, 0.01
  %v39 = vmax.f32 %v23, 0.01
  %v40 = vmax.f32 %v24, 0.01
  %v41 = vmax.f32 %v25, 0.01
  %v42 = vmax.f32 %v26, 0.01
  %v43 = vmax.f32 %v27, 0.01
  %v44 = vmax.f32 %v28, 0.01
  %v45 = vmax.f32 %v29, 0.01
  %v46 = vmax.f32 %v30, 0.01
  %v47 = vmax.f32 %v31, 0.01
  %v48 = vmax.f32 %v32, 0.01
  %v49 = vmax.f32 %v33, 0.01
  %v50 = vmul.f32 %v34, 100.0
  %v51 = vmul.f32 %v35, 100.0
  %v52 = vmul.f32 %v36, 100.0
  %v53 = vmul.f32 %v37, 100.0
  %v54 = vmul.f32 %v38, 100.0
  %v55 = vmul.f32 %v39, 100.0
  %v56 = vmul.f32 %v40, 100.0
  %v57 = vmul.f32 %v41, 100.0
  %v58 = vmul.f32 %v42, 100.0
  %v59 = vmul.f32 %v43, 100.0
  %v60 = vmul.f32 %v44, 100.0
  %v61 = vmul.f32 %v45, 100.0
  %v62 = vmul.f32 %v46, 100.0
  %v63 = vmul.f32 %v47, 100.0
  %v64 = vmul.f32 %v48, 100.0
  %v65 = vmul.f32 %v49, 100.0
  %v66 = vcvt.f32.s32.ties.to.even %v50
  %v67 = vcvt.f32.s32.ties.to.even %v51
  %v68 = vcvt.f32.s32.ties.to.even %v52
  %v69 = vcvt.f32.s32.ties.to.even %v53
  %v70 = vcvt.f32.s32.ties.to.even %v54
  %v71 = vcvt.f32.s32.ties.to.even %v55
  %v72 = vcvt.f32.s32.ties.to.even %v56
  %v73 = vcvt.f32.s32.ties.to.even %v57
  %v74 = vcvt.f32.s32.ties.to.even %v58
  %v75 = vcvt.f32.s32.ties.to.even %v59
  %v76 = vcvt.f32.s32.ties.to.even %v60
  %v77 = vcvt.f32.s32.ties.to.even %v61
  %v78 = vcvt.f32.s32.ties.to.even %v62
  %v79 = vcvt.f32.s32.ties.to.even %v63
  %v80 = vcvt.f32.s32.ties.to.even %v64
  %v81 = vcvt.f32.s32.ties.to.even %v65
  %v82 = vsub.s32 %v66, 1
  %v83 = vsub.s32 %v67, 1
  %v84 = vsub.s32 %v68, 1
  %v85 = vsub.s32 %v69, 1
  %v86 = vsub.s32 %v70, 1
  %v87 = vsub.s32 %v71, 1
  %v88 = vsub.s32 %v72, 1
  %v89 = vsub.s32 %v73, 1
  %v90 = vsub.s32 %v74, 1
  %v91 = vsub.s32 %v75, 1
  %v92 = vsub.s32 %v76, 1
  %v93 = vsub.s32 %v77, 1
  %v94 = vsub.s32 %v78, 1
  %v95 = vsub.s32 %v79, 1
  %v96 = vsub.s32 %v80, 1
  %v97 = vsub.s32 %v81, 1
  %vm98 = vcmp.gt.s32.totalorder %v82, 0
  %v99 = vsel %vm98, %v82, 0
  %vm100 = vcmp.gt.s32.totalorder %v83, 0
  %v101 = vsel %vm100, %v83, 0
  %vm102 = vcmp.gt.s32.totalorder %v84, 0
  %v103 = vsel %vm102, %v84, 0
  %vm104 = vcmp.gt.s32.totalorder %v85, 0
  %v105 = vsel %vm104, %v85, 0
  %vm106 = vcmp.gt.s32.totalorder %v86, 0
  %v107 = vsel %vm106, %v86, 0
  %vm108 = vcmp.gt.s32.totalorder %v87, 0
  %v109 = vsel %vm108, %v87, 0
  %vm110 = vcmp.gt.s32.totalorder %v88, 0
  %v111 = vsel %vm110, %v88, 0
  %vm112 = vcmp.gt.s32.totalorder %v89, 0
  %v113 = vsel %vm112, %v89, 0
  %vm114 = vcmp.gt.s32.totalorder %v90, 0
  %v115 = vsel %vm114, %v90, 0
  %vm116 = vcmp.gt.s32.totalorder %v91, 0
  %v117 = vsel %vm116, %v91, 0
  %vm118 = vcmp.gt.s32.totalorder %v92, 0
  %v119 = vsel %vm118, %v92, 0
  %vm120 = vcmp.gt.s32.totalorder %v93, 0
  %v121 = vsel %vm120, %v93, 0
  %vm122 = vcmp.gt.s32.totalorder %v94, 0
  %v123 = vsel %vm122, %v94, 0
  %vm124 = vcmp.gt.s32.totalorder %v95, 0
  %v125 = vsel %vm124, %v95, 0
  %vm126 = vcmp.gt.s32.totalorder %v96, 0
  %v127 = vsel %vm126, %v96, 0
  %vm128 = vcmp.gt.s32.totalorder %v97, 0
  %v129 = vsel %vm128, %v97, 0
  %vm130 = vcmp.lt.s32.totalorder %v99, 99
  %v131 = vsel %vm130, %v99, 99
  %vm132 = vcmp.lt.s32.totalorder %v101, 99
  %v133 = vsel %vm132, %v101, 99
  %vm134 = vcmp.lt.s32.totalorder %v103, 99
  %v135 = vsel %vm134, %v103, 99
  %vm136 = vcmp.lt.s32.totalorder %v105, 99
  %v137 = vsel %vm136, %v105, 99
  %vm138 = vcmp.lt.s32.totalorder %v107, 99
  %v139 = vsel %vm138, %v107, 99
  %vm140 = vcmp.lt.s32.totalorder %v109, 99
  %v141 = vsel %vm140, %v109, 99
  %vm142 = vcmp.lt.s32.totalorder %v111, 99
  %v143 = vsel %vm142, %v111, 99
  %vm144 = vcmp.lt.s32.totalorder %v113, 99
  %v145 = vsel %vm144, %v113, 99
  %vm146 = vcmp.lt.s32.totalorder %v115, 99
  %v147 = vsel %vm146, %v115, 99
  %vm148 = vcmp.lt.s32.totalorder %v117, 99
  %v149 = vsel %vm148, %v117, 99
  %vm150 = vcmp.lt.s32.totalorder %v119, 99
  %v151 = vsel %vm150, %v119, 99
  %vm152 = vcmp.lt.s32.totalorder %v121, 99
  %v153 = vsel %vm152, %v121, 99
  %vm154 = vcmp.lt.s32.totalorder %v123, 99
  %v155 = vsel %vm154, %v123, 99
  %vm156 = vcmp.lt.s32.totalorder %v125, 99
  %v157 = vsel %vm156, %v125, 99
  %vm158 = vcmp.lt.s32.totalorder %v127, 99
  %v159 = vsel %vm158, %v127, 99
  %vm160 = vcmp.lt.s32.totalorder %v129, 99
  %v161 = vsel %vm160, %v129, 99
  %v162 = vlaneseq
  %v163 = vand.u32 %v162, 127
  %164 = vset.pattern.permute.xlu0 0
  %165 = vperm.xlu0 %164, %v131
  %v166 = vpop.permute.xlu0 %165
  %167 = vset.pattern.permute.xlu0 0
  %168 = vperm.xlu0 %167, %v133
  %v169 = vpop.permute.xlu0 %168
  %170 = vset.pattern.permute.xlu0 0
  %171 = vperm.xlu0 %170, %v135
  %v172 = vpop.permute.xlu0 %171
  %173 = vset.pattern.permute.xlu0 0
  %174 = vperm.xlu0 %173, %v137
  %v175 = vpop.permute.xlu0 %174
  %176 = vset.pattern.permute.xlu0 0
  %177 = vperm.xlu0 %176, %v139
  %v178 = vpop.permute.xlu0 %177
  %179 = vset.pattern.permute.xlu0 0
  %180 = vperm.xlu0 %179, %v141
  %v181 = vpop.permute.xlu0 %180
  %182 = vset.pattern.permute.xlu0 0
  %183 = vperm.xlu0 %182, %v143
  %v184 = vpop.permute.xlu0 %183
  %185 = vset.pattern.permute.xlu0 0
  %186 = vperm.xlu0 %185, %v145
  %v187 = vpop.permute.xlu0 %186
  %188 = vset.pattern.permute.xlu0 0
  %189 = vperm.xlu0 %188, %v147
  %v190 = vpop.permute.xlu0 %189
  %191 = vset.pattern.permute.xlu0 0
  %192 = vperm.xlu0 %191, %v149
  %v193 = vpop.permute.xlu0 %192
  %194 = vset.pattern.permute.xlu0 0
  %195 = vperm.xlu0 %194, %v151
  %v196 = vpop.permute.xlu0 %195
  %197 = vset.pattern.permute.xlu0 0
  %198 = vperm.xlu0 %197, %v153
  %v199 = vpop.permute.xlu0 %198
  %200 = vset.pattern.permute.xlu0 0
  %201 = vperm.xlu0 %200, %v155
  %v202 = vpop.permute.xlu0 %201
  %203 = vset.pattern.permute.xlu0 0
  %204 = vperm.xlu0 %203, %v157
  %v205 = vpop.permute.xlu0 %204
  %206 = vset.pattern.permute.xlu0 0
  %207 = vperm.xlu0 %206, %v159
  %v208 = vpop.permute.xlu0 %207
  %209 = vset.pattern.permute.xlu0 0
  %210 = vperm.xlu0 %209, %v161
  %v211 = vpop.permute.xlu0 %210
  %vm212 = vcmp.eq.s32.totalorder %v166, %v163
  %vm213 = vcmp.eq.s32.totalorder %v169, %v163
  %vm214 = vcmp.eq.s32.totalorder %v172, %v163
  %vm215 = vcmp.eq.s32.totalorder %v175, %v163
  %vm216 = vcmp.eq.s32.totalorder %v178, %v163
  %vm217 = vcmp.eq.s32.totalorder %v181, %v163
  %vm218 = vcmp.eq.s32.totalorder %v184, %v163
  %vm219 = vcmp.eq.s32.totalorder %v187, %v163
  %vm220 = vcmp.eq.s32.totalorder %v190, %v163
  %vm221 = vcmp.eq.s32.totalorder %v193, %v163
  %vm222 = vcmp.eq.s32.totalorder %v196, %v163
  %vm223 = vcmp.eq.s32.totalorder %v199, %v163
  %vm224 = vcmp.eq.s32.totalorder %v202, %v163
  %vm225 = vcmp.eq.s32.totalorder %v205, %v163
  %vm226 = vcmp.eq.s32.totalorder %v208, %v163
  %vm227 = vcmp.eq.s32.totalorder %v211, %v163
  %v228 = vsel %vm212, 1, 0
  %v229 = vsel %vm213, 1, 0
  %v230 = vsel %vm214, 1, 0
  %v231 = vsel %vm215, 1, 0
  %v232 = vsel %vm216, 1, 0
  %v233 = vsel %vm217, 1, 0
  %v234 = vsel %vm218, 1, 0
  %v235 = vsel %vm219, 1, 0
  %v236 = vsel %vm220, 1, 0
  %v237 = vsel %vm221, 1, 0
  %v238 = vsel %vm222, 1, 0
  %v239 = vsel %vm223, 1, 0
  %v240 = vsel %vm224, 1, 0
  %v241 = vsel %vm225, 1, 0
  %v242 = vsel %vm226, 1, 0
  %v243 = vsel %vm227, 1, 0
  %v244 = vcvt.s32.f32 %v228
  %v245 = vcvt.s32.f32 %v229
  %v246 = vcvt.s32.f32 %v230
  %v247 = vcvt.s32.f32 %v231
  %v248 = vcvt.s32.f32 %v232
  %v249 = vcvt.s32.f32 %v233
  %v250 = vcvt.s32.f32 %v234
  %v251 = vcvt.s32.f32 %v235
  %v252 = vcvt.s32.f32 %v236
  %v253 = vcvt.s32.f32 %v237
  %v254 = vcvt.s32.f32 %v238
  %v255 = vcvt.s32.f32 %v239
  %v256 = vcvt.s32.f32 %v240
  %v257 = vcvt.s32.f32 %v241
  %v258 = vcvt.s32.f32 %v242
  %v259 = vcvt.s32.f32 %v243
  %v260 = vpack.c.bf16 %v245, %v244
  %v261 = vpack.c.bf16 %v247, %v246
  %v262 = vpack.c.bf16 %v249, %v248
  %v263 = vpack.c.bf16 %v251, %v250
  %v264 = vpack.c.bf16 %v253, %v252
  %v265 = vpack.c.bf16 %v255, %v254
  %v266 = vpack.c.bf16 %v257, %v256
  %v267 = vpack.c.bf16 %v259, %v258
  %v268 = vld [vmem:[%s1] sm:$0xf]
  %v269 = vld [vmem:[%s1 + $0x4] sm:$0xf]
  %v270 = vld [vmem:[%s1 + $0x8] sm:$0xf]
  %v271 = vld [vmem:[%s1 + $0xc] sm:$0xf]
  %v272 = vld [vmem:[%s1 + $0x10] sm:$0xf]
  %v273 = vld [vmem:[%s1 + $0x14] sm:$0xf]
  %v274 = vld [vmem:[%s1 + $0x18] sm:$0xf]
  %v275 = vld [vmem:[%s1 + $0x1c] sm:$0xf]
  %v276 = vld [vmem:[%s1 + $0x20] sm:$0xf]
  %v277 = vld [vmem:[%s1 + $0x24] sm:$0xf]
  %v278 = vld [vmem:[%s1 + $0x28] sm:$0xf]
  %v279 = vld [vmem:[%s1 + $0x2c] sm:$0xf]
  %v280 = vld [vmem:[%s1 + $0x30] sm:$0xf]
  %v281 = vld [vmem:[%s1 + $0x34] sm:$0xf]
  %v282 = vld [vmem:[%s1 + $0x38] sm:$0xf]
  %v283 = vld [vmem:[%s1 + $0x3c] sm:$0xf]
  %v284 = vld [vmem:[%s2] sm:$0xf]
  %v285 = vld [vmem:[%s2 + $0x4] sm:$0xf]
  %v286 = vld [vmem:[%s2 + $0x8] sm:$0xf]
  %v287 = vld [vmem:[%s2 + $0xc] sm:$0xf]
  %v288 = vld [vmem:[%s2 + $0x10] sm:$0xf]
  %v289 = vld [vmem:[%s2 + $0x14] sm:$0xf]
  %v290 = vld [vmem:[%s2 + $0x18] sm:$0xf]
  %v291 = vld [vmem:[%s2 + $0x1c] sm:$0xf]
  %v292 = vld [vmem:[%s2 + $0x20] sm:$0xf]
  %v293 = vld [vmem:[%s2 + $0x24] sm:$0xf]
  %v294 = vld [vmem:[%s2 + $0x28] sm:$0xf]
  %v295 = vld [vmem:[%s2 + $0x2c] sm:$0xf]
  %v296 = vld [vmem:[%s2 + $0x30] sm:$0xf]
  %v297 = vld [vmem:[%s2 + $0x34] sm:$0xf]
  %v298 = vld [vmem:[%s2 + $0x38] sm:$0xf]
  %v299 = vld [vmem:[%s2 + $0x3c] sm:$0xf]
  %v316 = vunpack.c.l.b16 %v284
  %v317 = vunpack.c.l.b16 %v285
  %v318 = vunpack.c.l.b16 %v286
  %v319 = vunpack.c.l.b16 %v287
  %v320 = vunpack.c.l.b16 %v288
  %v321 = vunpack.c.l.b16 %v289
  %v322 = vunpack.c.l.b16 %v290
  %v323 = vunpack.c.l.b16 %v291
  %v324 = vunpack.c.l.b16 %v292
  %v325 = vunpack.c.l.b16 %v293
  %v326 = vunpack.c.l.b16 %v294
  %v327 = vunpack.c.l.b16 %v295
  %v328 = vunpack.c.l.b16 %v296
  %v329 = vunpack.c.l.b16 %v297
  %v330 = vunpack.c.l.b16 %v298
  %v331 = vunpack.c.l.b16 %v299
  %v332 = vpack.c.b16 %v317, %v316
  %v333 = vpack.c.b16 %v319, %v318
  %v334 = vpack.c.b16 %v321, %v320
  %v335 = vpack.c.b16 %v323, %v322
  %v336 = vpack.c.b16 %v325, %v324
  %v337 = vpack.c.b16 %v327, %v326
  %v338 = vpack.c.b16 %v329, %v328
  %v339 = vpack.c.b16 %v331, %v330
  %348 = vmatprep.subr.bf16.mxu0 0
  %349 = vmatpush1.bf16.msra.mxu0 %v332
  %350 = vmatprep.subr.bf16.mxu0 0
  %351 = vmatpush1.bf16.msra.mxu0 %v333
  %352 = vmatprep.subr.bf16.mxu0 0
  %353 = vmatpush1.bf16.msra.mxu0 %v334
  %354 = vmatprep.subr.bf16.mxu0 0
  %355 = vmatpush1.bf16.msra.mxu0 %v335
  %356 = vmatprep.subr.bf16.mxu0 0
  %357 = vmatpush1.bf16.msra.mxu0 %v336
  %358 = vmatprep.subr.bf16.mxu0 0
  %359 = vmatpush1.bf16.msra.mxu0 %v337
  %360 = vmatprep.subr.bf16.mxu0 0
  %361 = vmatpush1.bf16.msra.mxu0 %v338
  %362 = vmatprep.subr.bf16.mxu0 0
  %363 = vmatpush1.bf16.msra.mxu0 %v339
  %364 = vmatprep.subr.bf16.mxu0 0
  %365 = vmatpush1.bf16.msra.mxu0 0
  %366 = vmatprep.subr.bf16.mxu0 0
  %367 = vmatpush1.bf16.msra.mxu0 0
  %368 = vmatprep.subr.bf16.mxu0 0
  %369 = vmatpush1.bf16.msra.mxu0 0
  %370 = vmatprep.subr.bf16.mxu0 0
  %371 = vmatpush1.bf16.msra.mxu0 0
  %372 = vmatprep.subr.bf16.mxu0 0
  %373 = vmatpush1.bf16.msra.mxu0 0
  %374 = vmatprep.subr.bf16.mxu0 0
  %375 = vmatpush1.bf16.msra.mxu0 0
  %376 = vmatprep.subr.bf16.mxu0 0
  %377 = vmatpush1.bf16.msra.mxu0 0
  %378 = vmatprep.subr.bf16.mxu0 0
  %379 = vmatpush1.bf16.msra.mxu0 0
  %380 = vmatprep.mubr.bf16.mxu0 0
  %381 = vmatmul.mubr.bf16.gmra.mrb[0].mxu0 %v260
  %v382 = vpop.f32.mrb[0].mxu0
  %v383 = vadd.f32 0.0, %v382
  %v384 = vpop.f32.mrb[0].mxu0
  %v385 = vpop.f32.mrb[0].mxu0
  %v386 = vadd.f32 0.0, %v385
  %v387 = vpop.f32.mrb[0].mxu0
  %388 = vmatprep.mubr.bf16.mxu0 0
  %389 = vmatmul.mubr.bf16.gmra.mrb[0].mxu0 %v261
  %v390 = vpop.f32.mrb[0].mxu0
  %v391 = vadd.f32 0.0, %v390
  %v392 = vpop.f32.mrb[0].mxu0
  %v393 = vpop.f32.mrb[0].mxu0
  %v394 = vadd.f32 0.0, %v393
  %v395 = vpop.f32.mrb[0].mxu0
  %396 = vmatprep.mubr.bf16.mxu0 0
  %397 = vmatmul.mubr.bf16.gmra.mrb[0].mxu0 %v262
  %v398 = vpop.f32.mrb[0].mxu0
  %v399 = vadd.f32 0.0, %v398
  %v400 = vpop.f32.mrb[0].mxu0
  %v401 = vpop.f32.mrb[0].mxu0
  %v402 = vadd.f32 0.0, %v401
  %v403 = vpop.f32.mrb[0].mxu0
  %404 = vmatprep.mubr.bf16.mxu0 0
  %405 = vmatmul.mubr.bf16.gmra.mrb[0].mxu0 %v263
  %v406 = vpop.f32.mrb[0].mxu0
  %v407 = vadd.f32 0.0, %v406
  %v408 = vpop.f32.mrb[0].mxu0
  %v409 = vpop.f32.mrb[0].mxu0
  %v410 = vadd.f32 0.0, %v409
  %v411 = vpop.f32.mrb[0].mxu0
  %412 = vmatprep.mubr.bf16.mxu0 0
  %413 = vmatmul.mubr.bf16.gmra.mrb[0].mxu0 %v264
  %v414 = vpop.f32.mrb[0].mxu0
  %v415 = vadd.f32 0.0, %v414
  %v416 = vpop.f32.mrb[0].mxu0
  %v417 = vpop.f32.mrb[0].mxu0
  %v418 = vadd.f32 0.0, %v417
  %v419 = vpop.f32.mrb[0].mxu0
  %420 = vmatprep.mubr.bf16.mxu0 0
  %421 = vmatmul.mubr.bf16.gmra.mrb[0].mxu0 %v265
  %v422 = vpop.f32.mrb[0].mxu0
  %v423 = vadd.f32 0.0, %v422
  %v424 = vpop.f32.mrb[0].mxu0
  %v425 = vpop.f32.mrb[0].mxu0
  %v426 = vadd.f32 0.0, %v425
  %v427 = vpop.f32.mrb[0].mxu0
  %428 = vmatprep.mubr.bf16.mxu0 0
  %429 = vmatmul.mubr.bf16.gmra.mrb[0].mxu0 %v266
  %v430 = vpop.f32.mrb[0].mxu0
  %v431 = vadd.f32 0.0, %v430
  %v432 = vpop.f32.mrb[0].mxu0
  %v433 = vpop.f32.mrb[0].mxu0
  %v434 = vadd.f32 0.0, %v433
  %v435 = vpop.f32.mrb[0].mxu0
  %436 = vmatprep.mubr.bf16.mxu0 0
  %437 = vmatmul.mubr.bf16.gmra.mrb[0].mxu0 %v267
  %v438 = vpop.f32.mrb[0].mxu0
  %v439 = vadd.f32 0.0, %v438
  %v440 = vpop.f32.mrb[0].mxu0
  %v441 = vpop.f32.mrb[0].mxu0
  %v442 = vadd.f32 0.0, %v441
  %v443 = vpop.f32.mrb[0].mxu0
  %444 = vdwg.mxu0
  %v461 = vunpack.c.l.b16 %v268
  %v462 = vunpack.c.l.b16 %v269
  %v463 = vunpack.c.l.b16 %v270
  %v464 = vunpack.c.l.b16 %v271
  %v465 = vunpack.c.l.b16 %v272
  %v466 = vunpack.c.l.b16 %v273
  %v467 = vunpack.c.l.b16 %v274
  %v468 = vunpack.c.l.b16 %v275
  %v469 = vunpack.c.l.b16 %v276
  %v470 = vunpack.c.l.b16 %v277
  %v471 = vunpack.c.l.b16 %v278
  %v472 = vunpack.c.l.b16 %v279
  %v473 = vunpack.c.l.b16 %v280
  %v474 = vunpack.c.l.b16 %v281
  %v475 = vunpack.c.l.b16 %v282
  %v476 = vunpack.c.l.b16 %v283
  %v477 = vpack.c.b16 %v462, %v461
  %v478 = vpack.c.b16 %v464, %v463
  %v479 = vpack.c.b16 %v466, %v465
  %v480 = vpack.c.b16 %v468, %v467
  %v481 = vpack.c.b16 %v470, %v469
  %v482 = vpack.c.b16 %v472, %v471
  %v483 = vpack.c.b16 %v474, %v473
  %v484 = vpack.c.b16 %v476, %v475
  %493 = vmatprep.subr.bf16.mxu0 0
  %494 = vmatpush1.bf16.msra.mxu0 %v477
  %495 = vmatprep.subr.bf16.mxu0 0
  %496 = vmatpush1.bf16.msra.mxu0 %v478
  %497 = vmatprep.subr.bf16.mxu0 0
  %498 = vmatpush1.bf16.msra.mxu0 %v479
  %499 = vmatprep.subr.bf16.mxu0 0
  %500 = vmatpush1.bf16.msra.mxu0 %v480
  %501 = vmatprep.subr.bf16.mxu0 0
  %502 = vmatpush1.bf16.msra.mxu0 %v481
  %503 = vmatprep.subr.bf16.mxu0 0
  %504 = vmatpush1.bf16.msra.mxu0 %v482
  %505 = vmatprep.subr.bf16.mxu0 0
  %506 = vmatpush1.bf16.msra.mxu0 %v483
  %507 = vmatprep.subr.bf16.mxu0 0
  %508 = vmatpush1.bf16.msra.mxu0 %v484
  %509 = vmatprep.subr.bf16.mxu0 0
  %510 = vmatpush1.bf16.msra.mxu0 0
  %511 = vmatprep.subr.bf16.mxu0 0
  %512 = vmatpush1.bf16.msra.mxu0 0
  %513 = vmatprep.subr.bf16.mxu0 0
  %514 = vmatpush1.bf16.msra.mxu0 0
  %515 = vmatprep.subr.bf16.mxu0 0
  %516 = vmatpush1.bf16.msra.mxu0 0
  %517 = vmatprep.subr.bf16.mxu0 0
  %518 = vmatpush1.bf16.msra.mxu0 0
  %519 = vmatprep.subr.bf16.mxu0 0
  %520 = vmatpush1.bf16.msra.mxu0 0
  %521 = vmatprep.subr.bf16.mxu0 0
  %522 = vmatpush1.bf16.msra.mxu0 0
  %523 = vmatprep.subr.bf16.mxu0 0
  %524 = vmatpush1.bf16.msra.mxu0 0
  %525 = vmatprep.mubr.bf16.mxu0 0
  %526 = vmatmul.mubr.bf16.gmra.mrb[0].mxu0 %v260
  %v527 = vpop.f32.mrb[0].mxu0
  %v528 = vadd.f32 %v383, %v527
  %v529 = vpop.f32.mrb[0].mxu0
  %v530 = vpop.f32.mrb[0].mxu0
  %v531 = vadd.f32 %v386, %v530
  %v532 = vpop.f32.mrb[0].mxu0
  %533 = vmatprep.mubr.bf16.mxu0 0
  %534 = vmatmul.mubr.bf16.gmra.mrb[0].mxu0 %v261
  %v535 = vpop.f32.mrb[0].mxu0
  %v536 = vadd.f32 %v391, %v535
  %v537 = vpop.f32.mrb[0].mxu0
  %v538 = vpop.f32.mrb[0].mxu0
  %v539 = vadd.f32 %v394, %v538
  %v540 = vpop.f32.mrb[0].mxu0
  %541 = vmatprep.mubr.bf16.mxu0 0
  %542 = vmatmul.mubr.bf16.gmra.mrb[0].mxu0 %v262
  %v543 = vpop.f32.mrb[0].mxu0
  %v544 = vadd.f32 %v399, %v543
  %v545 = vpop.f32.mrb[0].mxu0
  %v546 = vpop.f32.mrb[0].mxu0
  %v547 = vadd.f32 %v402, %v546
  %v548 = vpop.f32.mrb[0].mxu0
  %549 = vmatprep.mubr.bf16.mxu0 0
  %550 = vmatmul.mubr.bf16.gmra.mrb[0].mxu0 %v263
  %v551 = vpop.f32.mrb[0].mxu0
  %v552 = vadd.f32 %v407, %v551
  %v553 = vpop.f32.mrb[0].mxu0
  %v554 = vpop.f32.mrb[0].mxu0
  %v555 = vadd.f32 %v410, %v554
  %v556 = vpop.f32.mrb[0].mxu0
  %557 = vmatprep.mubr.bf16.mxu0 0
  %558 = vmatmul.mubr.bf16.gmra.mrb[0].mxu0 %v264
  %v559 = vpop.f32.mrb[0].mxu0
  %v560 = vadd.f32 %v415, %v559
  %v561 = vpop.f32.mrb[0].mxu0
  %v562 = vpop.f32.mrb[0].mxu0
  %v563 = vadd.f32 %v418, %v562
  %v564 = vpop.f32.mrb[0].mxu0
  %565 = vmatprep.mubr.bf16.mxu0 0
  %566 = vmatmul.mubr.bf16.gmra.mrb[0].mxu0 %v265
  %v567 = vpop.f32.mrb[0].mxu0
  %v568 = vadd.f32 %v423, %v567
  %v569 = vpop.f32.mrb[0].mxu0
  %v570 = vpop.f32.mrb[0].mxu0
  %v571 = vadd.f32 %v426, %v570
  %v572 = vpop.f32.mrb[0].mxu0
  %573 = vmatprep.mubr.bf16.mxu0 0
  %574 = vmatmul.mubr.bf16.gmra.mrb[0].mxu0 %v266
  %v575 = vpop.f32.mrb[0].mxu0
  %v576 = vadd.f32 %v431, %v575
  %v577 = vpop.f32.mrb[0].mxu0
  %v578 = vpop.f32.mrb[0].mxu0
  %v579 = vadd.f32 %v434, %v578
  %v580 = vpop.f32.mrb[0].mxu0
  %581 = vmatprep.mubr.bf16.mxu0 0
  %582 = vmatmul.mubr.bf16.gmra.mrb[0].mxu0 %v267
  %v583 = vpop.f32.mrb[0].mxu0
  %v584 = vadd.f32 %v439, %v583
  %v585 = vpop.f32.mrb[0].mxu0
  %v586 = vpop.f32.mrb[0].mxu0
  %v587 = vadd.f32 %v442, %v586
  %v588 = vpop.f32.mrb[0].mxu0
  %589 = vdwg.mxu0
  %v590 = vld [vmem:[%s3] sm:$0xf]
  %v591 = vld [vmem:[%s3 + $0x4] sm:$0xf]
  %v592 = vld [vmem:[%s3 + $0x8] sm:$0xf]
  %v593 = vld [vmem:[%s3 + $0xc] sm:$0xf]
  %v594 = vld [vmem:[%s3 + $0x10] sm:$0xf]
  %v595 = vld [vmem:[%s3 + $0x14] sm:$0xf]
  %v596 = vld [vmem:[%s3 + $0x18] sm:$0xf]
  %v597 = vld [vmem:[%s3 + $0x1c] sm:$0xf]
  %v598 = vld [vmem:[%s3 + $0x20] sm:$0xf]
  %v599 = vld [vmem:[%s3 + $0x24] sm:$0xf]
  %v600 = vld [vmem:[%s3 + $0x28] sm:$0xf]
  %v601 = vld [vmem:[%s3 + $0x2c] sm:$0xf]
  %v602 = vld [vmem:[%s3 + $0x30] sm:$0xf]
  %v603 = vld [vmem:[%s3 + $0x34] sm:$0xf]
  %v604 = vld [vmem:[%s3 + $0x38] sm:$0xf]
  %v605 = vld [vmem:[%s3 + $0x3c] sm:$0xf]
  %v622 = vunpack.c.l.b16 %v590
  %v623 = vunpack.c.l.b16 %v591
  %v624 = vunpack.c.l.b16 %v592
  %v625 = vunpack.c.l.b16 %v593
  %v626 = vunpack.c.l.b16 %v594
  %v627 = vunpack.c.l.b16 %v595
  %v628 = vunpack.c.l.b16 %v596
  %v629 = vunpack.c.l.b16 %v597
  %v630 = vunpack.c.l.b16 %v598
  %v631 = vunpack.c.l.b16 %v599
  %v632 = vunpack.c.l.b16 %v600
  %v633 = vunpack.c.l.b16 %v601
  %v634 = vunpack.c.l.b16 %v602
  %v635 = vunpack.c.l.b16 %v603
  %v636 = vunpack.c.l.b16 %v604
  %v637 = vunpack.c.l.b16 %v605
  %v638 = vpack.c.b16 %v623, %v622
  %v639 = vpack.c.b16 %v625, %v624
  %v640 = vpack.c.b16 %v627, %v626
  %v641 = vpack.c.b16 %v629, %v628
  %v642 = vpack.c.b16 %v631, %v630
  %v643 = vpack.c.b16 %v633, %v632
  %v644 = vpack.c.b16 %v635, %v634
  %v645 = vpack.c.b16 %v637, %v636
  %654 = vmatprep.subr.bf16.mxu0 0
  %655 = vmatpush1.bf16.msra.mxu0 %v638
  %656 = vmatprep.subr.bf16.mxu0 0
  %657 = vmatpush1.bf16.msra.mxu0 %v639
  %658 = vmatprep.subr.bf16.mxu0 0
  %659 = vmatpush1.bf16.msra.mxu0 %v640
  %660 = vmatprep.subr.bf16.mxu0 0
  %661 = vmatpush1.bf16.msra.mxu0 %v641
  %662 = vmatprep.subr.bf16.mxu0 0
  %663 = vmatpush1.bf16.msra.mxu0 %v642
  %664 = vmatprep.subr.bf16.mxu0 0
  %665 = vmatpush1.bf16.msra.mxu0 %v643
  %666 = vmatprep.subr.bf16.mxu0 0
  %667 = vmatpush1.bf16.msra.mxu0 %v644
  %668 = vmatprep.subr.bf16.mxu0 0
  %669 = vmatpush1.bf16.msra.mxu0 %v645
  %670 = vmatprep.subr.bf16.mxu0 0
  %671 = vmatpush1.bf16.msra.mxu0 0
  %672 = vmatprep.subr.bf16.mxu0 0
  %673 = vmatpush1.bf16.msra.mxu0 0
  %674 = vmatprep.subr.bf16.mxu0 0
  %675 = vmatpush1.bf16.msra.mxu0 0
  %676 = vmatprep.subr.bf16.mxu0 0
  %677 = vmatpush1.bf16.msra.mxu0 0
  %678 = vmatprep.subr.bf16.mxu0 0
  %679 = vmatpush1.bf16.msra.mxu0 0
  %680 = vmatprep.subr.bf16.mxu0 0
  %681 = vmatpush1.bf16.msra.mxu0 0
  %682 = vmatprep.subr.bf16.mxu0 0
  %683 = vmatpush1.bf16.msra.mxu0 0
  %684 = vmatprep.subr.bf16.mxu0 0
  %685 = vmatpush1.bf16.msra.mxu0 0
  %686 = vmatprep.mubr.bf16.mxu0 0
  %687 = vmatmul.mubr.bf16.gmra.mrb[0].mxu0 %v260
  %v688 = vpop.f32.mrb[0].mxu0
  %v689 = vadd.f32 0.0, %v688
  %v690 = vpop.f32.mrb[0].mxu0
  %v691 = vpop.f32.mrb[0].mxu0
  %v692 = vadd.f32 0.0, %v691
  %v693 = vpop.f32.mrb[0].mxu0
  %694 = vmatprep.mubr.bf16.mxu0 0
  %695 = vmatmul.mubr.bf16.gmra.mrb[0].mxu0 %v261
  %v696 = vpop.f32.mrb[0].mxu0
  %v697 = vadd.f32 0.0, %v696
  %v698 = vpop.f32.mrb[0].mxu0
  %v699 = vpop.f32.mrb[0].mxu0
  %v700 = vadd.f32 0.0, %v699
  %v701 = vpop.f32.mrb[0].mxu0
  %702 = vmatprep.mubr.bf16.mxu0 0
  %703 = vmatmul.mubr.bf16.gmra.mrb[0].mxu0 %v262
  %v704 = vpop.f32.mrb[0].mxu0
  %v705 = vadd.f32 0.0, %v704
  %v706 = vpop.f32.mrb[0].mxu0
  %v707 = vpop.f32.mrb[0].mxu0
  %v708 = vadd.f32 0.0, %v707
  %v709 = vpop.f32.mrb[0].mxu0
  %710 = vmatprep.mubr.bf16.mxu0 0
  %711 = vmatmul.mubr.bf16.gmra.mrb[0].mxu0 %v263
  %v712 = vpop.f32.mrb[0].mxu0
  %v713 = vadd.f32 0.0, %v712
  %v714 = vpop.f32.mrb[0].mxu0
  %v715 = vpop.f32.mrb[0].mxu0
  %v716 = vadd.f32 0.0, %v715
  %v717 = vpop.f32.mrb[0].mxu0
  %718 = vmatprep.mubr.bf16.mxu0 0
  %719 = vmatmul.mubr.bf16.gmra.mrb[0].mxu0 %v264
  %v720 = vpop.f32.mrb[0].mxu0
  %v721 = vadd.f32 0.0, %v720
  %v722 = vpop.f32.mrb[0].mxu0
  %v723 = vpop.f32.mrb[0].mxu0
  %v724 = vadd.f32 0.0, %v723
  %v725 = vpop.f32.mrb[0].mxu0
  %726 = vmatprep.mubr.bf16.mxu0 0
  %727 = vmatmul.mubr.bf16.gmra.mrb[0].mxu0 %v265
  %v728 = vpop.f32.mrb[0].mxu0
  %v729 = vadd.f32 0.0, %v728
  %v730 = vpop.f32.mrb[0].mxu0
  %v731 = vpop.f32.mrb[0].mxu0
  %v732 = vadd.f32 0.0, %v731
  %v733 = vpop.f32.mrb[0].mxu0
  %734 = vmatprep.mubr.bf16.mxu0 0
  %735 = vmatmul.mubr.bf16.gmra.mrb[0].mxu0 %v266
  %v736 = vpop.f32.mrb[0].mxu0
  %v737 = vadd.f32 0.0, %v736
  %v738 = vpop.f32.mrb[0].mxu0
  %v739 = vpop.f32.mrb[0].mxu0
  %v740 = vadd.f32 0.0, %v739
  %v741 = vpop.f32.mrb[0].mxu0
  %742 = vmatprep.mubr.bf16.mxu0 0
  %743 = vmatmul.mubr.bf16.gmra.mrb[0].mxu0 %v267
  %v744 = vpop.f32.mrb[0].mxu0
  %v745 = vadd.f32 0.0, %v744
  %v746 = vpop.f32.mrb[0].mxu0
  %v747 = vpop.f32.mrb[0].mxu0
  %v748 = vadd.f32 0.0, %v747
  %v749 = vpop.f32.mrb[0].mxu0
  %750 = vdwg.mxu0
  %v751 = vadd.f32 %v528, %v689
  %v752 = vadd.f32 %v531, %v692
  %v753 = vadd.f32 %v536, %v697
  %v754 = vadd.f32 %v539, %v700
  %v755 = vadd.f32 %v544, %v705
  %v756 = vadd.f32 %v547, %v708
  %v757 = vadd.f32 %v552, %v713
  %v758 = vadd.f32 %v555, %v716
  %v759 = vadd.f32 %v560, %v721
  %v760 = vadd.f32 %v563, %v724
  %v761 = vadd.f32 %v568, %v729
  %v762 = vadd.f32 %v571, %v732
  %v763 = vadd.f32 %v576, %v737
  %v764 = vadd.f32 %v579, %v740
  %v765 = vadd.f32 %v584, %v745
  %v766 = vadd.f32 %v587, %v748
  %vm767 = vcmask 130048
  %768 = vst.msk [vmem:[%s4] sm:$0xff] %vm767, %v751
  %769 = vst.msk [vmem:[%s4 + $0x8] sm:$0xff] %vm767, %v752
  %770 = vst.msk [vmem:[%s4 + $0x10] sm:$0xff] %vm767, %v753
  %771 = vst.msk [vmem:[%s4 + $0x18] sm:$0xff] %vm767, %v754
  %772 = vst.msk [vmem:[%s4 + $0x20] sm:$0xff] %vm767, %v755
  %773 = vst.msk [vmem:[%s4 + $0x28] sm:$0xff] %vm767, %v756
  %774 = vst.msk [vmem:[%s4 + $0x30] sm:$0xff] %vm767, %v757
  %775 = vst.msk [vmem:[%s4 + $0x38] sm:$0xff] %vm767, %v758
  %776 = vst.msk [vmem:[%s4 + $0x40] sm:$0xff] %vm767, %v759
  %777 = vst.msk [vmem:[%s4 + $0x48] sm:$0xff] %vm767, %v760
  %778 = vst.msk [vmem:[%s4 + $0x50] sm:$0xff] %vm767, %v761
  %779 = vst.msk [vmem:[%s4 + $0x58] sm:$0xff] %vm767, %v762
  %780 = vst.msk [vmem:[%s4 + $0x60] sm:$0xff] %vm767, %v763
  %781 = vst.msk [vmem:[%s4 + $0x68] sm:$0xff] %vm767, %v764
  %782 = vst.msk [vmem:[%s4 + $0x70] sm:$0xff] %vm767, %v765
  %783 = vst.msk [vmem:[%s4 + $0x78] sm:$0xff] %vm767, %v766
  // Predicated region
  $region18: #{tpu_custom_call.1} parent=0 // pred_check
    _
  $region19: #{tpu_custom_call.1} parent=0 // pred_check_branch
    %785 = sbr.rel (0) target = $region21
  $region20: #{tpu_custom_call.1} parent=0 // pred_region
    _
  $region21: #{tpu_custom_call.1} parent=0 // pred_fallthru
    _
  // Predicated region
  $region22: #{tpu_custom_call.1} parent=0 // pred_check
    _
  $region23: #{tpu_custom_call.1} parent=0 // pred_check_branch
    %787 = sbr.rel (0) target = $region25
  $region24: #{tpu_custom_call.1} parent=0 // pred_region
    _
  $region25: #{tpu_custom_call.1} parent=0 // pred_fallthru
    _

</llo_original>
